<compile_context>
chip_gen: v6e
topology: v6e:2x2x1
jax: 0.10.0
libtpu: 0.0.40
codegen_flags: <defaults>
</compile_context>

<pallas_src>
import math
import functools

import jax
import jax.numpy as jnp
from jax.experimental import pallas as pl
from jax.experimental.pallas import tpu as pltpu


def _round_up(x, m):
    return ((x + m - 1) // m) * m


def _cdiv(a, b):
    return (a + b - 1) // b


_DEFAULT_VMEM_BYTES = 64 * 1024 * 1024  # conservative: v7x per-TC VMEM


@functools.lru_cache(maxsize=1)
def _vmem_capacity_bytes():
    """Best-effort query of per-core VMEM capacity; conservative fallback."""
    try:
        info = pltpu.get_tpu_info()
        for name in ("vmem_capacity_bytes", "vmem_bytes", "vmem_size_bytes"):
            v = getattr(info, name, None)
            if v:
                return int(v)
    except Exception:
        pass
    return _DEFAULT_VMEM_BYTES


def _pick_tiles(M, K, N, in_itemsize, out_itemsize, needs_acc, vmem_budget,
                force_tk=None):
    """Pick (tm, tk, tn).

    tm: sublane-multiple row tile; tn: lane-multiple output tile (lane-dense
    stores); tk: the full K when it fits in a single step (no K masking
    needed), otherwise a 512-wide chunk.
    """
    tm = min(1024, _round_up(M, 8))
    tn = min(1024, _round_up(N, 128))
    if force_tk is not None:
        tk = K if force_tk == K else _round_up(min(force_tk, K), 128)
    else:
        tk = K if K <= 1024 else 512

    def footprint(tm_, tn_, tk_):
        # double-buffered inputs + double-buffered output (+ tiny bias)
        f = 2 * (tm_ * tk_ + tk_ * tn_) * in_itemsize
        f += 2 * tm_ * tn_ * out_itemsize
        f += 2 * tn_ * in_itemsize
        if needs_acc:
            f += tm_ * tn_ * 4
        return f

    # Shrink (keeping multiples of 256 where possible) until the working set
    # fits the VMEM budget.
    while footprint(tm, tn, tk) > vmem_budget:
        if tm >= tn and tm > 256:
            tm = max(256, tm // 2)
        elif tn > 256:
            tn = max(256, tn // 2)
        elif tk > 256 and tk != K:
            tk = max(256, tk // 2)
        else:
            break

    # v7x megacore: ensure at least one "parallel" grid axis has >1 block.
    if _cdiv(M, tm) == 1 and _cdiv(N, tn) == 1:
        if M > 8:
            tm = _round_up(_cdiv(M, 2), 8)
        elif N > 128:
            tn = _round_up(_cdiv(N, 2), 128)
    return tm, tk, tn


def _make_kernel(*, use_bias, use_acc, compute_dtype, k_total, tk, mask_k_tail):
    """Build a kernel specialized on the static configuration."""

    def kernel(*refs):
        if use_bias:
            x_ref, w_ref, b_ref, o_ref = refs[0], refs[1], refs[2], refs[3]
        else:
            x_ref, w_ref, o_ref = refs[0], refs[1], refs[2]
            b_ref = None
        # When the output is f32 it doubles as the resident accumulator
        # (its block index is constant across k), so no scratch is needed.
        acc_ref = refs[-1] if use_acc else o_ref

        k = pl.program_id(2)
        nk = pl.num_programs(2)

        x_tile = x_ref[...]
        if mask_k_tail:
            # Zero the K-tail of the x tile.  Only the last k block is
            # actually partial; for earlier blocks the bound >= tk so the
            # select is an always-true no-op hidden under the MXU.
            rem = k_total - k * tk
            col = jax.lax.broadcasted_iota(jnp.int32, x_tile.shape, 1)
            x_tile = jnp.where(col < rem, x_tile, 0)
        w_tile = w_ref[...]
        if compute_dtype is not None:
            x_tile = x_tile.astype(compute_dtype)
            w_tile = w_tile.astype(compute_dtype)

        prod = jnp.dot(x_tile, w_tile, preferred_element_type=jnp.float32)

        @pl.when(k == 0)
        def _():
            acc_ref[...] = prod

        @pl.when(k > 0)
        def _():
            acc_ref[...] += prod

        if use_bias or use_acc:
            @pl.when(k == nk - 1)
            def _():
                result = acc_ref[...]
                if use_bias:
                    result = result + b_ref[...].astype(jnp.float32)
                o_ref[...] = result.astype(o_ref.dtype)

    return kernel


@functools.partial(jax.jit, static_argnames=("use_bias", "precision", "force_tk"))
def graph_convolution(x, weight, bias=None, *, use_bias=False,
                      precision="float32", force_tk=None):
    """Pallas implementation of GraphConvolution.forward.

    x:       (B, N, F_in)  (any leading dims; last dim = F_in)
    weight:  (F_in, F_out)
    bias:    (1, 1, F_out) or None
    precision: "float32" (default, matches the PyTorch module) or "bfloat16"
               (bf16 MXU inputs, f32 accumulation).
    returns: x @ weight (+ bias), shape (..., F_out)
    """
    *lead, F_in = x.shape
    F_out = weight.shape[1]
    M = math.prod(lead) if lead else 1
    x2d = x.reshape(M, F_in)                       # free reshape, no copy
    out_dtype = x.dtype

    compute_dtype = None
    if precision in ("bfloat16", "bf16"):
        if x.dtype != jnp.bfloat16 or weight.dtype != jnp.bfloat16:
            compute_dtype = jnp.bfloat16
    elif precision not in ("float32", "fp32", "highest"):
        raise ValueError(f"unknown precision: {precision!r}")

    use_acc = (out_dtype != jnp.float32)
    in_itemsize = x.dtype.itemsize
    out_itemsize = jnp.dtype(out_dtype).itemsize

    vmem_cap = _vmem_capacity_bytes()
    vmem_limit = max(32 << 20, min(vmem_cap - (8 << 20), 100 << 20))
    vmem_budget = int(vmem_limit * 0.8)

    tm, tk, tn = _pick_tiles(M, F_in, F_out, in_itemsize, out_itemsize,
                             use_acc, vmem_budget, force_tk=force_tk)

    nk = _cdiv(F_in, tk)
    Kp = nk * tk
    mask_k_tail = (F_in % tk) != 0

    # Only the (small) weight gets zero-padded, and only along K, and only
    # when K is actually split into partial chunks.  x and the output are
    # never padded/copied.
    w_p = weight
    if Kp != F_in:
        w_p = jnp.pad(weight, ((0, Kp - F_in), (0, 0)))

    inputs = [x2d, w_p]
    in_specs = [
        pl.BlockSpec((tm, tk), lambda i, j, k: (i, k)),
        pl.BlockSpec((tk, tn), lambda i, j, k: (k, j)),
    ]
    if use_bias:
        inputs.append(bias.reshape(1, F_out))
        in_specs.append(pl.BlockSpec((1, tn), lambda i, j, k: (0, j)))

    scratch_shapes = [pltpu.VMEM((tm, tn), jnp.float32)] if use_acc else []

    grid = (_cdiv(M, tm), _cdiv(F_out, tn), nk)
    n_i, n_j = grid[0], grid[1]

    # Account for re-reads under this grid order: x is streamed once per
    # F_out tile, W once per M tile.
    bytes_accessed = (M * F_in * in_itemsize * n_j
                      + Kp * F_out * weight.dtype.itemsize * n_i
                      + M * F_out * out_itemsize)
    if use_bias:
        bytes_accessed += F_out * bias.dtype.itemsize * n_i * n_j
    cost = pl.CostEstimate(flops=2 * M * F_in * F_out,
                           transcendentals=0,
                           bytes_accessed=int(bytes_accessed))

    kernel = _make_kernel(use_bias=use_bias, use_acc=use_acc,
                          compute_dtype=compute_dtype, k_total=F_in, tk=tk,
                          mask_k_tail=mask_k_tail)

    out2d = pl.pallas_call(
        kernel,
        out_shape=jax.ShapeDtypeStruct((M, F_out), out_dtype),
        grid_spec=pltpu.PrefetchScalarGridSpec(
            num_scalar_prefetch=0,
            grid=grid,
            in_specs=in_specs,
            out_specs=pl.BlockSpec((tm, tn), lambda i, j, k: (i, j)),
            scratch_shapes=scratch_shapes,
        ),
        compiler_params=pltpu.CompilerParams(
            dimension_semantics=("parallel", "parallel", "arbitrary"),
            vmem_limit_bytes=int(vmem_limit),
        ),
        cost_estimate=cost,
    )(*inputs)

    return out2d.reshape(*lead, F_out)


def init_graph_convolution_params(key, in_features, out_features, bias=False):
    """Deterministic init matching the PyTorch module's init_parameters()."""
    std = 1.0 / math.sqrt(out_features)
    kw, kb = jax.random.split(key)
    weight = jax.random.uniform(
        kw, (in_features, out_features), minval=-std, maxval=std,
        dtype=jnp.float32)
    b = None
    if bias:
        b = jax.random.uniform(
            kb, (1, 1, out_features), minval=-std, maxval=std,
            dtype=jnp.float32)
    return weight, b


if __name__ == "__main__":
    key = jax.random.PRNGKey(0)
    kx, kp = jax.random.split(key)

    # Case 1: default module config (bias=False), small aligned-ish shapes.
    B, N, F_in, F_out = 2, 8, 32, 64
    x = jax.random.normal(kx, (B, N, F_in), dtype=jnp.float32)
    w0, _ = init_graph_convolution_params(kp, F_in, F_out, bias=False)
    out_nb = jax.block_until_ready(graph_convolution(x, w0, use_bias=False))
    ref_nb = x @ w0
    assert out_nb.shape == (B, N, F_out)
    assert jnp.allclose(out_nb, ref_nb, atol=1e-5, rtol=1e-5)

    # Case 2: bias=True config.
    w1, b1 = init_graph_convolution_params(kp, F_in, F_out, bias=True)
    out_b = jax.block_until_ready(graph_convolution(x, w1, b1, use_bias=True))
    ref_b = x @ w1 + b1
    assert out_b.shape == (B, N, F_out)
    assert jnp.allclose(out_b, ref_b, atol=1e-5, rtol=1e-5)

    # Case 3: larger, non-aligned shapes -> partial M / F_out boundary blocks,
    # no padding of x, no output slice.
    B2, N2, Fi2, Fo2 = 4, 300, 200, 257
    x2 = jax.random.normal(jax.random.PRNGKey(1), (B2, N2, Fi2),
                           dtype=jnp.float32)
    w2, b2 = init_graph_convolution_params(jax.random.PRNGKey(2), Fi2, Fo2,
                                           bias=True)
    out2 = jax.block_until_ready(graph_convolution(x2, w2, b2, use_bias=True))
    ref2 = x2 @ w2 + b2
    assert out2.shape == (B2, N2, Fo2)
    assert jnp.allclose(out2, ref2, atol=1e-4, rtol=1e-4)

    # Case 4: force a split K with a tail (tk=128, K=200) to exercise the
    # in-kernel K-tail masking + weight K-pad path.
    out3 = jax.block_until_ready(
        graph_convolution(x2, w2, b2, use_bias=True, force_tk=128))
    assert jnp.allclose(out3, ref2, atol=1e-4, rtol=1e-4)

    # Case 5: bf16 MXU compute path (f32 inputs/outputs, bf16 matmul operands).
    out_bf = jax.block_until_ready(
        graph_convolution(x2, w2, b2, use_bias=True, precision="bfloat16"))
    assert jnp.allclose(out_bf, ref2, atol=1e-1, rtol=1e-1)

    # Case 6: bf16 inputs/outputs -> f32 scratch-accumulator path.
    x2b, w2b, b2b = (x2.astype(jnp.bfloat16), w2.astype(jnp.bfloat16),
                     b2.astype(jnp.bfloat16))
    out_bb = jax.block_until_ready(
        graph_convolution(x2b, w2b, b2b, use_bias=True))
    assert out_bb.dtype == jnp.bfloat16
    assert jnp.allclose(out_bb.astype(jnp.float32), ref2, atol=1e-1, rtol=1e-1)

    print("KERNEL_OK")
</pallas_src>

<mosaic_0001>
module attributes {stable_mosaic.version = 11 : i64} {
  func.func @kernel(%arg0: i32, %arg1: i32, %arg2: i32, %arg3: memref<8x32xf32, #tpu.memory_space<vmem>>, %arg4: memref<32x128xf32, #tpu.memory_space<vmem>>, %arg5: memref<8x128xf32, #tpu.memory_space<vmem>>) attributes {dimension_semantics = [#tpu.dimension_semantics<parallel>, #tpu.dimension_semantics<parallel>, #tpu.dimension_semantics<arbitrary>], iteration_bounds = array<i64: 2, 1, 1>, scalar_prefetch = 0 : i64, scratch_operands = 0 : i64, tpu.core_type = #tpu.core_type<tc>, window_params = [{transform_indices = @transform_0, window_bounds = array<i64: 8, 32>}, {transform_indices = @transform_1, window_bounds = array<i64: 32, 128>}, {transform_indices = @transform_2, window_bounds = array<i64: 8, 128>}]} {
    %c0 = arith.constant 0 : index
    %c0_0 = arith.constant 0 : index
    %0 = vector.load %arg3[%c0, %c0_0] : memref<8x32xf32, #tpu.memory_space<vmem>>, vector<8x32xf32>
    %c0_1 = arith.constant 0 : index
    %c0_2 = arith.constant 0 : index
    %1 = vector.load %arg4[%c0_1, %c0_2] : memref<32x128xf32, #tpu.memory_space<vmem>>, vector<32x128xf32>
    %cst = arith.constant dense<0.000000e+00> : vector<8x128xf32>
    %2 = tpu.matmul %0, %1, %cst {dimension_numbers = #tpu.dot_dimension_numbers<[1], [0], [0], [1], [0, 0, 1, 1], [], []>} : vector<8x32xf32>, vector<32x128xf32>, vector<8x128xf32> -> vector<8x128xf32>
    %c0_i32 = arith.constant 0 : i32
    %3 = arith.cmpi eq, %arg2, %c0_i32 : i32
    %4 = arith.extui %3 : i1 to i32
    %c0_i32_3 = arith.constant 0 : i32
    %5 = arith.cmpi ne, %4, %c0_i32_3 : i32
    scf.if %5 {
      %c0_6 = arith.constant 0 : index
      %c0_7 = arith.constant 0 : index
      %9 = vector.load %arg5[%c0_6, %c0_7] : memref<8x128xf32, #tpu.memory_space<vmem>>, vector<8x128xf32>
      tpu.vector_store %arg5[%c0_6, %c0_7], %2 {strides = array<i32>} : memref<8x128xf32, #tpu.memory_space<vmem>>, vector<8x128xf32>,
    } else {
    }
    %c0_i32_4 = arith.constant 0 : i32
    %6 = arith.cmpi sgt, %arg2, %c0_i32_4 : i32
    %7 = arith.extui %6 : i1 to i32
    %c0_i32_5 = arith.constant 0 : i32
    %8 = arith.cmpi ne, %7, %c0_i32_5 : i32
    scf.if %8 {
      %c0_6 = arith.constant 0 : index
      %c0_7 = arith.constant 0 : index
      %9 = vector.load %arg5[%c0_6, %c0_7] : memref<8x128xf32, #tpu.memory_space<vmem>>, vector<8x128xf32>
      %10 = arith.addf %9, %2 : vector<8x128xf32>
      %c0_8 = arith.constant 0 : index
      %c0_9 = arith.constant 0 : index
      %11 = vector.load %arg5[%c0_8, %c0_9] : memref<8x128xf32, #tpu.memory_space<vmem>>, vector<8x128xf32>
      tpu.vector_store %arg5[%c0_8, %c0_9], %10 {strides = array<i32>} : memref<8x128xf32, #tpu.memory_space<vmem>>, vector<8x128xf32>,
    } else {
    }
    return
  }
  func.func @transform_0(%arg0: i32, %arg1: i32, %arg2: i32) -> (i32, i32) {
    %c0_i32 = arith.constant 0 : i32
    return %arg0, %arg2 : i32, i32
  }
  func.func @transform_1(%arg0: i32, %arg1: i32, %arg2: i32) -> (i32, i32) {
    %c0_i32 = arith.constant 0 : i32
    return %arg2, %arg1 : i32, i32
  }
  func.func @transform_2(%arg0: i32, %arg1: i32, %arg2: i32) -> (i32, i32) {
    %c0_i32 = arith.constant 0 : i32
    return %arg0, %arg1 : i32, i32
  }
}

</mosaic_0001>

<llo_original>
// kernel: graph_convolution.1
$region0: #{graph_convolution.1}
  #allocation0 [shape = 'u32[]', space=smem, size = 0x4, offset = 0x4, fixed_abs, tag = 'smem constant byte address 0x4 - core index']
  #allocation1 [shape = 'u32[144,128]{1,0:T(1,128)}', space=vmem, size = 0x12000, scoped, tag = 'internal scratch']
  %s0 = inlined_call_operand.hbm [shape: f32[16,32], index: 0, kind: input, shape index: {}]
  %s1 = inlined_call_operand.hbm [shape: f32[32,64], index: 1, kind: input, shape index: {}]
  %s2 = inlined_call_operand.hbm [shape: f32[16,64], index: 2, kind: output, shape index: {}]
  %s3 = sld [smem:[#allocation0]]
  $region57: #{graph_convolution.1} parent=0
    _
  %s5 = ssub.s32 1, %s3
  %s6 = scalar_select 0, %s5, %s3
  $region1: #{graph_convolution.1} parent=0
    #allocation2 [shape = 'u8[8192]{0}', space=vmem, size = 0x2000, scoped, tag = 'input window, operand 0']
    #allocation3 [shape = 's32[2]{0}', space=sflag, size = 0x8, scoped, tag = 'scoped memory for graph_convolution.1']
    #allocation4 [shape = 's32[2]{0}', space=sflag, size = 0x8, scoped, tag = 'scoped memory for graph_convolution.1']
    #allocation5 [shape = 'u8[16384]{0}', space=vmem, size = 0x4000, scoped, tag = 'input window, operand 1, single buffered']
    #allocation6 [shape = 's32[1]{0}', space=sflag, size = 0x4, scoped, tag = 'scoped memory for graph_convolution.1']
    #allocation7 [shape = 'u8[8192]{0}', space=vmem, size = 0x2000, scoped, tag = 'output window, operand 0']
    %7 = vsyncpa [#allocation3], 0
    %s8 = scalar_lea.sflag [#allocation3], 1
    %9 = vsyncpa %s8, 0
    %10 = vsyncpa [#allocation6], 0
    %11 = vsyncpa [#allocation4], 0
    %s12 = scalar_lea.sflag [#allocation4], 1
    %13 = vsyncpa %s12, 0
    loop: start=0, step=1, limit=4
    $region2: #{graph_convolution.1} parent=1 // loop_pre_header
      _
    $region3: #{graph_convolution.1} parent=1 // loop_header
      %s15 = sphi 0, %s19
      %p16 = scmp.ge.s32.totalorder %s15, 4
      %s22 = sphi 0, %s41
      %s23 = sphi 0, %s37
      %s24 = sphi 0, %s33
      %s25 = sphi 0, %s22
      %s26 = sphi 0, %s23
      %s27 = sphi 0, %s24
      %s28 = sphi 0, %s25
      %s29 = sphi 0, %s26
      %s30 = sphi 0, %s27
      %s46 = sphi 0, %s48
      %s49 = sphi 0, %s46
      %s50 = sphi 0, %s49
      %s66 = sphi 0, %s50
      %s74 = sphi 0, %s76
      %s77 = sphi 0, %s74
      %s78 = sphi 0, %s77
      %s94 = sphi 0, %s78
      %s102 = sphi 0, %s104
      %s105 = sphi 0, %s102
      %s106 = sphi 0, %s105
      %s122 = sphi 0, %s106
    $region4: #{graph_convolution.1} parent=1 // loop_header_branch
      %18 = sbr.rel (%p16) target = $region8
    $region5: #{graph_convolution.1} parent=1 // loop_body
      %s20 = ssub.s32 %s15, 1
      %s21 = ssub.s32 %s15, 2
      %s31 = sadd.s32 1, %s24
      %p32 = scmp.ge.s32.totalorder %s31, 1
      %s33 = scalar_select %p32, 0, %s31
      %s34 = sadd.s32 1, %s23
      %s35 = scalar_select %p32, %s34, %s23
      %p36 = scmp.ge.s32.totalorder %s35, 1
      %s37 = scalar_select %p36, 0, %s35
      %s38 = sadd.s32 1, %s22
      %s39 = scalar_select %p36, %s38, %s22
      %p40 = scmp.ge.s32.totalorder %s39, 2
      %s41 = scalar_select %p40, 0, %s39
      %s42 = ssub.s32 %s22, %s41
      %s43 = ssub.s32 %s24, %s33
      %s44 = sor.u32 %s42, %s43
      %p45 = scmp.eq.s32.totalorder %s44, 0
      %s47 = sadd.s32 %s46, 1
      %s48 = scalar_select %p45, %s46, %s47
      %p51 = pneg %p45
      %p52 = scmp.eq.s32.totalorder %s15, 1
      %p53 = por %p51, %p52
      %p54 = scmp.ne.s32.totalorder %s46, %s49
      %p55 = scmp.eq.s32.totalorder %s15, 0
      %p56 = por %p54, %p55
      %p57 = scmp.ne.s32.totalorder %s46, %s49
      %p58 = scmp.eq.s32.totalorder %s20, 1
      %p59 = por %p57, %p58
      %p60 = scmp.ne.s32.totalorder %s49, %s50
      %p61 = scmp.eq.s32.totalorder %s20, 0
      %p62 = por %p60, %p61
      %p63 = scmp.ne.s32.totalorder %s49, %s50
      %p64 = scmp.eq.s32.totalorder %s21, 1
      %p65 = por %p63, %p64
      %p67 = scmp.ne.s32.totalorder %s50, %s66
      %p68 = scmp.eq.s32.totalorder %s21, 0
      %p69 = por %p67, %p68
      %s70 = ssub.s32 %s24, %s33
      %s71 = ssub.s32 %s23, %s37
      %s72 = sor.u32 %s70, %s71
      %p73 = scmp.eq.s32.totalorder %s72, 0
      %s75 = sadd.s32 %s74, 1
      %s76 = scalar_select %p73, %s74, %s75
      %p79 = pneg %p73
      %p80 = scmp.eq.s32.totalorder %s15, 1
      %p81 = por %p79, %p80
      %p82 = scmp.ne.s32.totalorder %s74, %s77
      %p83 = scmp.eq.s32.totalorder %s15, 0
      %p84 = por %p82, %p83
      %p85 = scmp.ne.s32.totalorder %s74, %s77
      %p86 = scmp.eq.s32.totalorder %s20, 1
      %p87 = por %p85, %p86
      %p88 = scmp.ne.s32.totalorder %s77, %s78
      %p89 = scmp.eq.s32.totalorder %s20, 0
      %p90 = por %p88, %p89
      %p91 = scmp.ne.s32.totalorder %s77, %s78
      %p92 = scmp.eq.s32.totalorder %s21, 1
      %p93 = por %p91, %p92
      %p95 = scmp.ne.s32.totalorder %s78, %s94
      %p96 = scmp.eq.s32.totalorder %s21, 0
      %p97 = por %p95, %p96
      %s98 = ssub.s32 %s22, %s41
      %s99 = ssub.s32 %s23, %s37
      %s100 = sor.u32 %s98, %s99
      %p101 = scmp.eq.s32.totalorder %s100, 0
      %s103 = sadd.s32 %s102, 1
      %s104 = scalar_select %p101, %s102, %s103
      %p107 = pneg %p101
      %p108 = scmp.eq.s32.totalorder %s15, 1
      %p109 = por %p107, %p108
      %p110 = scmp.ne.s32.totalorder %s102, %s105
      %p111 = scmp.eq.s32.totalorder %s15, 0
      %p112 = por %p110, %p111
      %p113 = scmp.ne.s32.totalorder %s102, %s105
      %p114 = scmp.eq.s32.totalorder %s20, 1
      %p115 = por %p113, %p114
      %p116 = scmp.ne.s32.totalorder %s105, %s106
      %p117 = scmp.eq.s32.totalorder %s20, 0
      %p118 = por %p116, %p117
      %p119 = scmp.ne.s32.totalorder %s105, %s106
      %p120 = scmp.eq.s32.totalorder %s21, 1
      %p121 = por %p119, %p120
      %p123 = scmp.ne.s32.totalorder %s106, %s122
      %p124 = scmp.eq.s32.totalorder %s21, 0
      %p125 = por %p123, %p124
      %p126 = scmp.le.s32.totalorder 1, %s15
      %p127 = scmp.lt.s32.totalorder %s15, 3
      %p128 = pnand %p126, %p127
      %p129 = pneg %p128
      // Predicated region
      $region9: #{graph_convolution.1} parent=5 // pred_check
        _
      $region10: #{graph_convolution.1} parent=5 // pred_check_branch
        %131 = sbr.rel (%p128) target = $region12
      $region11: #{graph_convolution.1} parent=5 // pred_region
        %s132 = ssub.s32 %s15, 1
        // Predicated region
        $region13: #{graph_convolution.1} parent=11 // pred_check
          %p133 = pneg %p90
        $region14: #{graph_convolution.1} parent=11 // pred_check_branch
          %135 = sbr.rel (%p133) target = $region16
        $region15: #{graph_convolution.1} parent=11 // pred_region
          %s136 = smul.u32 4, %s27
          %s138 = ssub.s32 512, 512
          %139 = vsyncadd [#allocation6], %s138
          %s140 = sadd.s32 %s26, %s136
          %s141 = smul.addr %s140, 128
          %s142 = scalar_lea.hbm %s1, %s141
          %s143 = sshll.u32 [#allocation5], 4
          %s144 = int_to_ptr.vmem [resolvable:$true] %s143
          %149 = dma.hbm_to_vmem [thread:$0]  %s142, 512, %s144, [#allocation6], 128, 128, 8
        $region16: #{graph_convolution.1} parent=11 // pred_fallthru
          _
      $region12: #{graph_convolution.1} parent=5 // pred_fallthru
        _
      %p150 = scmp.lt.s32.totalorder %s15, 2
      // Predicated region
      $region17: #{graph_convolution.1} parent=5 // pred_check
        %p151 = pneg %p150
      $region18: #{graph_convolution.1} parent=5 // pred_check_branch
        %153 = sbr.rel (%p151) target = $region20
      $region19: #{graph_convolution.1} parent=5 // pred_region
        // Predicated region
        $region21: #{graph_convolution.1} parent=19 // pred_check
          %p154 = pneg %p56
        $region22: #{graph_convolution.1} parent=19 // pred_check_branch
          %156 = sbr.rel (%p154) target = $region24
        $region23: #{graph_convolution.1} parent=19 // pred_region
          %s157 = sand.u32 %s46, 1
          %s158 = scalar_lea.sflag [#allocation3], %s157
          %s159 = sand.u32 %s46, 1
          %s160 = smul.addr %s159, 8
          %s161 = scalar_lea.vmem [#allocation2], %s160
          %s163 = ssub.s32 128, 128
          %164 = vsyncadd %s158, %s163
          %s165 = sadd.s32 %s24, %s22
          %s166 = smul.addr %s165, 128
          %s167 = scalar_lea.hbm %s0, %s166
          %s169 = sshll.u32 %s161, 4
          %s170 = int_to_ptr.vmem [resolvable:$true] %s169
          %172 = dma.hbm_to_vmem [thread:$0]  %s167, 128, %s170, %s158
        $region24: #{graph_convolution.1} parent=19 // pred_fallthru
          _
      $region20: #{graph_convolution.1} parent=5 // pred_fallthru
        _
      %p173 = scmp.le.s32.totalorder 1, %s15
      %p174 = scmp.lt.s32.totalorder %s15, 3
      %p175 = pnand %p173, %p174
      %p176 = pneg %p175
      // Predicated region
      $region25: #{graph_convolution.1} parent=5 // pred_check
        _
      $region26: #{graph_convolution.1} parent=5 // pred_check_branch
        %178 = sbr.rel (%p175) target = $region28
      $region27: #{graph_convolution.1} parent=5 // pred_region
        %s179 = ssub.s32 %s15, 1
        %s180 = sand.u32 %s49, 1
        %s181 = scalar_lea.sflag [#allocation3], %s180
        %s182 = sand.u32 %s49, 1
        %s183 = smul.addr %s182, 8
        %s184 = scalar_lea.vmem [#allocation2], %s183
        // Predicated region
        $region29: #{graph_convolution.1} parent=27 // pred_check
          %p185 = pneg %p62
        $region30: #{graph_convolution.1} parent=27 // pred_check_branch
          %187 = sbr.rel (%p185) target = $region32
        $region31: #{graph_convolution.1} parent=27 // pred_region
          %188 = dma.done %s181, 128
        $region32: #{graph_convolution.1} parent=27 // pred_fallthru
          _
        // Predicated region
        $region33: #{graph_convolution.1} parent=27 // pred_check
          %p189 = pneg %p90
        $region34: #{graph_convolution.1} parent=27 // pred_check_branch
          %191 = sbr.rel (%p189) target = $region36
        $region35: #{graph_convolution.1} parent=27 // pred_region
          %192 = dma.done [#allocation6], 512
        $region36: #{graph_convolution.1} parent=27 // pred_fallthru
          _
        %s193 = sand.u32 %s49, 1
        %s194 = scalar_lea.sflag [#allocation3], %s193
        %s195 = sand.u32 %s49, 1
        %s196 = smul.addr %s195, 8
        %s197 = scalar_lea.vmem [#allocation2], %s196
        %p198 = pneg %p62
        %p199 = pneg %p59
        %p200 = pneg %p90
        %p201 = pneg %p87
        %p202 = pneg %p118
        %p203 = pneg %p115
        %s204 = sand.u32 %s105, 1
        %s205 = scalar_lea.sflag [#allocation4], %s204
        %s206 = sand.u32 %s105, 1
        %s207 = smul.addr %s206, 8
        %s208 = scalar_lea.vmem [#allocation7], %s207
        %s209 = smul.u32 4, %s27
        %v210 = vld [vmem:[%s184] sm:$0xff]
        %v211 = vld [vmem:[#allocation5] sm:$0xff]
        %v212 = vld [vmem:[#allocation5 + $0x8] sm:$0xff]
        %v213 = vld [vmem:[#allocation5 + $0x10] sm:$0xff]
        %v214 = vld [vmem:[#allocation5 + $0x18] sm:$0xff]
        %vm215 = vcmask 261120
        %v217 = vsel %vm215, %v210, 0
        %219 = vmatprep.subr.mxu0 0.0
        %220 = vmatpush1.msra.mxu0 0.0
        %221 = vmatprep.subr.mxu0 0.0
        %222 = vmatpush1.msra.mxu0 0.0
        %223 = vmatprep.subr.mxu0 0.0
        %224 = vmatpush1.msra.mxu0 0.0
        %225 = vmatprep.subr.mxu0 0.0
        %226 = vmatpush1.msra.mxu0 0.0
        %227 = vmatprep.subr.mxu0 0.0
        %228 = vmatpush1.msra.mxu0 0.0
        %229 = vmatprep.subr.mxu0 0.0
        %230 = vmatpush1.msra.mxu0 0.0
        %231 = vmatprep.subr.mxu0 0.0
        %232 = vmatpush1.msra.mxu0 0.0
        %233 = vmatprep.subr.mxu0 0.0
        %234 = vmatpush1.msra.mxu0 0.0
        %235 = vmatprep.subr.mxu0 0.0
        %236 = vmatpush1.msra.mxu0 0.0
        %237 = vmatprep.subr.mxu0 0.0
        %238 = vmatpush1.msra.mxu0 0.0
        %239 = vmatprep.subr.mxu0 0.0
        %240 = vmatpush1.msra.mxu0 0.0
        %241 = vmatprep.subr.mxu0 0.0
        %242 = vmatpush1.msra.mxu0 0.0
        %243 = vmatprep.subr.mxu0 0.0
        %244 = vmatpush1.msra.mxu0 %v214
        %245 = vmatprep.subr.mxu0 0.0
        %246 = vmatpush1.msra.mxu0 %v213
        %247 = vmatprep.subr.mxu0 0.0
        %248 = vmatpush1.msra.mxu0 %v212
        %249 = vmatprep.subr.mxu0 0.0
        %250 = vmatpush1.msra.mxu0 %v211
        %251 = vmatprep.subr.mxu0 0.0
        %252 = vmatpush2.msra.mxu0 0.0
        %253 = vmatprep.subr.mxu0 0.0
        %254 = vmatpush2.msra.mxu0 0.0
        %255 = vmatprep.subr.mxu0 0.0
        %256 = vmatpush2.msra.mxu0 0.0
        %257 = vmatprep.subr.mxu0 0.0
        %258 = vmatpush2.msra.mxu0 0.0
        %259 = vmatprep.subr.mxu0 0.0
        %260 = vmatpush2.msra.mxu0 0.0
        %261 = vmatprep.subr.mxu0 0.0
        %262 = vmatpush2.msra.mxu0 0.0
        %263 = vmatprep.subr.mxu0 0.0
        %264 = vmatpush2.msra.mxu0 0.0
        %265 = vmatprep.subr.mxu0 0.0
        %266 = vmatpush2.msra.mxu0 0.0
        %267 = vmatprep.subr.mxu0 0.0
        %268 = vmatpush2.msra.mxu0 0.0
        %269 = vmatprep.subr.mxu0 0.0
        %270 = vmatpush2.msra.mxu0 0.0
        %271 = vmatprep.subr.mxu0 0.0
        %272 = vmatpush2.msra.mxu0 0.0
        %273 = vmatprep.subr.mxu0 0.0
        %274 = vmatpush2.msra.mxu0 0.0
        %275 = vmatprep.subr.mxu0 0.0
        %276 = vmatpush2.msra.mxu0 0.0
        %277 = vmatprep.subr.mxu0 0.0
        %278 = vmatpush2.msra.mxu0 0.0
        %279 = vmatprep.subr.mxu0 0.0
        %280 = vmatpush2.msra.mxu0 0.0
        %281 = vmatprep.subr.mxu0 0.0
        %282 = vmatpush2.msra.mxu0 0.0
        %283 = vmatprep.mubr.f32.mxu0 0.0
        %284 = vmatmul.mubr.f32.gmra.mxu0 %v217
        %v285 = vpop.f32.mrf.mxu0
        %v286 = vadd.f32 0.0, %v285
        %v287 = vpop.f32.mrf.mxu0
        %288 = vdwg.mxu0
        %p289 = scmp.eq.s32.totalorder %s27, 0
        // Predicated region
        $region37: #{graph_convolution.1} parent=27 // pred_check
          %p290 = pneg %p289
        $region38: #{graph_convolution.1} parent=27 // pred_check_branch
          %292 = sbr.rel (%p290) target = $region40
        $region39: #{graph_convolution.1} parent=27 // pred_region
          %293 = vst [vmem:[%s208] sm:$0xff] %v286
        $region40: #{graph_convolution.1} parent=27 // pred_fallthru
          _
        %p294 = scmp.gt.s32.totalorder %s27, 0
        // Predicated region
        $region41: #{graph_convolution.1} parent=27 // pred_check
          %p295 = pneg %p294
        $region42: #{graph_convolution.1} parent=27 // pred_check_branch
          %297 = sbr.rel (%p295) target = $region44
        $region43: #{graph_convolution.1} parent=27 // pred_region
          %v298 = vld [vmem:[%s208] sm:$0xff]
          %v299 = vadd.f32 %v298, %v286
          %300 = vst [vmem:[%s208] sm:$0xff] %v299
        $region44: #{graph_convolution.1} parent=27 // pred_fallthru
          _
        %s301 = sand.u32 %s105, 1
        %s302 = scalar_lea.sflag [#allocation4], %s301
        %s303 = sand.u32 %s105, 1
        %s304 = smul.addr %s303, 8
        %s305 = scalar_lea.vmem [#allocation7], %s304
        // Predicated region
        $region45: #{graph_convolution.1} parent=27 // pred_check
          %p306 = pneg %p115
        $region46: #{graph_convolution.1} parent=27 // pred_check_branch
          %308 = sbr.rel (%p306) target = $region48
        $region47: #{graph_convolution.1} parent=27 // pred_region
          %s310 = ssub.s32 128, 128
          %311 = vsyncadd %s302, %s310
          %s312 = sadd.s32 %s26, %s25
          %s313 = smul.addr %s312, 128
          %s314 = scalar_lea.hbm %s2, %s313
          %s316 = sshll.u32 %s305, 4
          %s317 = int_to_ptr.vmem [resolvable:$true] %s316
          %319 = dma.vmem_to_hbm [thread:$0]  %s317, 128, %s314, %s302
        $region48: #{graph_convolution.1} parent=27 // pred_fallthru
          _
      $region28: #{graph_convolution.1} parent=5 // pred_fallthru
        _
      %p320 = scmp.le.s32.totalorder 2, %s15
      // Predicated region
      $region49: #{graph_convolution.1} parent=5 // pred_check
        %p321 = pneg %p320
      $region50: #{graph_convolution.1} parent=5 // pred_check_branch
        %323 = sbr.rel (%p321) target = $region52
      $region51: #{graph_convolution.1} parent=5 // pred_region
        %s324 = ssub.s32 %s15, 2
        // Predicated region
        $region53: #{graph_convolution.1} parent=51 // pred_check
          %p325 = pneg %p121
        $region54: #{graph_convolution.1} parent=51 // pred_check_branch
          %327 = sbr.rel (%p325) target = $region56
        $region55: #{graph_convolution.1} parent=51 // pred_region
          %s328 = sand.u32 %s106, 1
          %s329 = scalar_lea.sflag [#allocation4], %s328
          %s330 = sand.u32 %s106, 1
          %s331 = smul.addr %s330, 8
          %s332 = scalar_lea.vmem [#allocation7], %s331
          %333 = dma.done %s329, 128
        $region56: #{graph_convolution.1} parent=51 // pred_fallthru
          _
      $region52: #{graph_convolution.1} parent=5 // pred_fallthru
        _
    $region6: #{graph_convolution.1} parent=1 // loop_footer
      %s19 = sadd.s32 1, %s15
    $region7: #{graph_convolution.1} parent=1 // loop_footer_branch
      %14 = sbr.rel target = $region3
    $region8: #{graph_convolution.1} parent=1 // loop_exit
      _
    %334 = vsyncpa [#allocation3], 1
    %s335 = scalar_lea.sflag [#allocation3], 1
    %336 = vsyncpa %s335, 1
    %337 = vsyncpa [#allocation6], 1
    %338 = vsyncpa [#allocation4], 1
    %s339 = scalar_lea.sflag [#allocation4], 1
    %340 = vsyncpa %s339, 1

</llo_original>
